<compile_context>
chip_gen: v6e
topology: v6e:2x2x1
jax: 0.10.0
libtpu: 0.0.40
codegen_flags: <defaults>
</compile_context>

<pallas_src>
import functools

import jax
import jax.numpy as jnp
from jax import lax
from jax.experimental import pallas as pl
from jax.experimental.pallas import tpu as pltpu


def attention_pool_kernel(x_ref, wq_ref, bq_ref, wk_ref, bk_ref, o_ref,
                          xsum, weff, c_sc, m_sc, l_sc, acc,
                          *, n_rows, block_n):
    p = pl.program_id(0)           # 0: column-sum pass, 1: score/pool pass
    i = pl.program_id(1)           # tile index along N
    nt = pl.num_programs(1)

    # Valid-row mask for the (possibly padded) last tile.
    row = i * block_n + lax.broadcasted_iota(jnp.int32, (block_n, 1), 0)
    valid = row < n_rows                                            # (TN, 1)

    x = x_ref[...]                                                  # (TN, D) native dtype
    xf = jnp.where(valid, x.astype(jnp.float32), 0.0)               # masked f32 tile

    @pl.when(jnp.logical_and(p == 0, i == 0))
    def _init():
        xsum[...] = jnp.zeros_like(xsum)
        m_sc[...] = jnp.full_like(m_sc, -jnp.inf)
        l_sc[...] = jnp.zeros_like(l_sc)
        acc[...] = jnp.zeros_like(acc)

    @pl.when(p == 0)
    def _pass0():
        # Streaming column sum of x (needed because scores depend on K.sum(0)).
        xsum[...] += jnp.sum(xf, axis=0, keepdims=True)             # (1, D)

    @pl.when(p == 1)
    def _pass1():
        @pl.when(i == 0)
        def _finalize_weights():
            # K.sum(0) = x.sum(0) @ Wk + N * bk                      (1, D//8)
            k_sum = (jnp.dot(xsum[...], wk_ref[...],
                             preferred_element_type=jnp.float32)
                     + jnp.float32(n_rows) * bk_ref[...].astype(jnp.float32))
            # w_eff (lane-dense (1, D)): contract the D//8 axis of Wq with k_sum.
            weff[...] = lax.dot_general(
                k_sum, wq_ref[...], (((1,), (1,)), ((), ())),
                preferred_element_type=jnp.float32)
            # c = bq . K.sum(0)  (constant shift; kept for numerical fidelity)
            c_sc[...] = jnp.sum(bq_ref[...].astype(jnp.float32) * k_sum,
                                axis=1, keepdims=True)

        # Per-row scores: s = x . w_eff + c  (VPU broadcast-mul + lane reduce;
        # no (N, N) energy matrix, no transposes).
        s = jnp.sum(xf * weff[...], axis=1, keepdims=True) + c_sc[...]
        s = jnp.where(valid, s, -jnp.inf)                           # (TN, 1)

        # Online softmax (flash-style) + weighted-row accumulation.
        m_new = jnp.maximum(m_sc[...], jnp.max(s, axis=0, keepdims=True))
        alpha = jnp.exp(m_sc[...] - m_new)
        e = jnp.exp(s - m_new)                                      # padded rows -> 0
        l_sc[...] = alpha * l_sc[...] + jnp.sum(e, axis=0, keepdims=True)
        acc[...] = alpha * acc[...] + jnp.sum(e * xf, axis=0, keepdims=True)
        m_sc[...] = m_new

        @pl.when(i == nt - 1)
        def _finalize():
            o_ref[...] = (acc[...] *
                          pl.reciprocal(l_sc[...], approx=True)).astype(o_ref.dtype)


def attention_pool(x, wq, bq, wk, bk, *, block_n=None):
    n, d = x.shape
    dk = wq.shape[1]
    if block_n is None:
        # Tile the N (row) axis; keep tiles a multiple of 8 (sublane) unless the
        # whole array fits in one block.  Sized conservatively for v7x's 64 MiB VMEM.
        block_n = n if n <= 256 else 256
    if block_n != n:
        assert block_n % 8 == 0, "block_n must be a multiple of 8 (sublane tiling)"
    nt = pl.cdiv(n, block_n)

    kernel = functools.partial(attention_pool_kernel, n_rows=n, block_n=block_n)
    const = lambda p, i: (0, 0)
    itemsize = jnp.dtype(x.dtype).itemsize
    cost = pl.CostEstimate(
        flops=6 * n * d + 4 * d * dk,                 # ~two streaming passes over x
        transcendentals=n + 2 * nt,
        bytes_accessed=2 * n * d * itemsize
        + (wq.size + wk.size + bq.size + bk.size) * 4 + d * 4,
    )

    return pl.pallas_call(
        kernel,
        out_shape=jax.ShapeDtypeStruct((1, d), jnp.float32),
        grid_spec=pltpu.PrefetchScalarGridSpec(
            num_scalar_prefetch=0,
            grid=(2, nt),                              # (pass, N-tile); both sequential
            in_specs=[
                pl.BlockSpec((block_n, d), lambda p, i: (i, 0)),   # x tile (streamed)
                pl.BlockSpec((d, dk), const),                      # Wq (resident)
                pl.BlockSpec((1, dk), const),                      # bq
                pl.BlockSpec((d, dk), const),                      # Wk
                pl.BlockSpec((1, dk), const),                      # bk
            ],
            out_specs=pl.BlockSpec((1, d), const),
            scratch_shapes=[
                pltpu.VMEM((1, d), jnp.float32),    # xsum = x.sum(0)
                pltpu.VMEM((1, d), jnp.float32),    # w_eff (lane-dense)
                pltpu.VMEM((1, 1), jnp.float32),    # c (constant score shift)
                pltpu.VMEM((1, 1), jnp.float32),    # running softmax max m
                pltpu.VMEM((1, 1), jnp.float32),    # running softmax denom l
                pltpu.VMEM((1, d), jnp.float32),    # weighted-row accumulator
            ],
        ),
        compiler_params=pltpu.CompilerParams(
            dimension_semantics=("arbitrary", "arbitrary")),
        cost_estimate=cost,
    )(x, wq, bq, wk, bk)


def attention_pool_ref(x, wq, bq, wk, bk):
    q = x @ wq + bq
    k = x @ wk + bk
    energy = q @ k.T
    s = energy.sum(1, keepdims=True)
    attn = jax.nn.softmax(s, axis=0)
    return attn.T @ x


if __name__ == "__main__":
    # Small shapes consistent with the module: x (N, D), Linear(D, D//8).
    N, D = 64, 256
    key = jax.random.PRNGKey(0)
    kx, kwq, kbq, kwk, kbk = jax.random.split(key, 5)

    x = jax.random.normal(kx, (N, D), dtype=jnp.float32)
    # nn.Linear(D, D//8) weights, stored pre-transposed as (D, D//8) for x @ W.
    wq = jax.random.normal(kwq, (D, D // 8), dtype=jnp.float32) * 0.02
    bq = jax.random.normal(kbq, (1, D // 8), dtype=jnp.float32) * 0.1
    wk = jax.random.normal(kwk, (D, D // 8), dtype=jnp.float32) * 0.02
    bk = jax.random.normal(kbk, (1, D // 8), dtype=jnp.float32) * 0.1

    # block_n=16 exercises the 2-pass, multi-tile grid (4 tiles per pass).
    out = attention_pool(x, wq, bq, wk, bk, block_n=16)
    out = jax.block_until_ready(out)

    ref = attention_pool_ref(x, wq, bq, wk, bk)
    assert out.shape == (1, D)
    # Tolerance covers the (exact) algebraic reassociation and the EUP approx
    # reciprocal used for the softmax denominator.
    assert jnp.allclose(out, ref, atol=2e-3, rtol=2e-3), float(jnp.max(jnp.abs(out - ref)))

    print("KERNEL_OK")
</pallas_src>

<mosaic_0001>
module attributes {stable_mosaic.version = 11 : i64} {
  func.func @attention_pool_kernel(%arg0: i32, %arg1: i32, %arg2: memref<16x256xf32, #tpu.memory_space<vmem>>, %arg3: memref<256x32xf32, #tpu.memory_space<vmem>>, %arg4: memref<1x32xf32, #tpu.memory_space<vmem>>, %arg5: memref<256x32xf32, #tpu.memory_space<vmem>>, %arg6: memref<1x32xf32, #tpu.memory_space<vmem>>, %arg7: memref<1x256xf32, #tpu.memory_space<vmem>>, %arg8: memref<1x256xf32, #tpu.memory_space<vmem>>, %arg9: memref<1x256xf32, #tpu.memory_space<vmem>>, %arg10: memref<1x1xf32, #tpu.memory_space<vmem>>, %arg11: memref<1x1xf32, #tpu.memory_space<vmem>>, %arg12: memref<1x1xf32, #tpu.memory_space<vmem>>, %arg13: memref<1x256xf32, #tpu.memory_space<vmem>>) attributes {dimension_semantics = [#tpu.dimension_semantics<arbitrary>, #tpu.dimension_semantics<arbitrary>], iteration_bounds = array<i64: 2, 4>, scalar_prefetch = 0 : i64, scratch_operands = 6 : i64, tpu.core_type = #tpu.core_type<tc>, window_params = [{transform_indices = @transform_0, window_bounds = array<i64: 16, 256>}, {pipeline_mode = #tpu.pipeline_mode<synchronous>, transform_indices = @transform_1, window_bounds = array<i64: 256, 32>}, {pipeline_mode = #tpu.pipeline_mode<synchronous>, transform_indices = @transform_2, window_bounds = array<i64: 1, 32>}, {pipeline_mode = #tpu.pipeline_mode<synchronous>, transform_indices = @transform_3, window_bounds = array<i64: 256, 32>}, {pipeline_mode = #tpu.pipeline_mode<synchronous>, transform_indices = @transform_4, window_bounds = array<i64: 1, 32>}, {pipeline_mode = #tpu.pipeline_mode<synchronous>, transform_indices = @transform_5, window_bounds = array<i64: 1, 256>}]} {
    %c16_i32 = arith.constant 16 : i32
    %0 = arith.muli %arg1, %c16_i32 : i32
    %1 = tpu.iota {dimensions = array<i32: 0>} : vector<16x1xi32>
    %2 = vector.broadcast %0 : i32 to vector<16x1xi32>
    %3 = arith.addi %2, %1 : vector<16x1xi32>
    %c64_i32 = arith.constant 64 : i32
    %4 = vector.broadcast %c64_i32 : i32 to vector<16x1xi32>
    %5 = arith.cmpi slt, %3, %4 : vector<16x1xi32>
    %c0 = arith.constant 0 : index
    %c0_0 = arith.constant 0 : index
    %6 = vector.load %arg2[%c0, %c0_0] : memref<16x256xf32, #tpu.memory_space<vmem>>, vector<16x256xf32>
    %cst = arith.constant 0.000000e+00 : f32
    %7 = vector.shape_cast %5 : vector<16x1xi1> to vector<16x1xi1>
    %8 = vector.broadcast %7 : vector<16x1xi1> to vector<16x256xi1>
    %9 = vector.broadcast %cst : f32 to vector<16x256xf32>
    %10 = arith.select %8, %6, %9 : vector<16x256xi1>, vector<16x256xf32>
    %c0_i32 = arith.constant 0 : i32
    %11 = arith.cmpi eq, %arg0, %c0_i32 : i32
    %c0_i32_1 = arith.constant 0 : i32
    %12 = arith.cmpi eq, %arg1, %c0_i32_1 : i32
    %13 = arith.andi %11, %12 : i1
    %14 = arith.extui %13 : i1 to i32
    %c0_i32_2 = arith.constant 0 : i32
    %15 = arith.cmpi ne, %14, %c0_i32_2 : i32
    scf.if %15 {
      %cst_6 = arith.constant 0.000000e+00 : f32
      %22 = vector.broadcast %cst_6 : f32 to vector<1x256xf32>
      %c0_7 = arith.constant 0 : index
      %c0_8 = arith.constant 0 : index
      %23 = vector.load %arg8[%c0_7, %c0_8] : memref<1x256xf32, #tpu.memory_space<vmem>>, vector<1x256xf32>
      tpu.vector_store %arg8[%c0_7, %c0_8], %22 {strides = array<i32>} : memref<1x256xf32, #tpu.memory_space<vmem>>, vector<1x256xf32>,
      %cst_9 = arith.constant 0xFF800000 : f32
      %24 = vector.broadcast %cst_9 : f32 to vector<1x1xf32>
      %c0_10 = arith.constant 0 : index
      %c0_11 = arith.constant 0 : index
      %25 = vector.load %arg11[%c0_10, %c0_11] : memref<1x1xf32, #tpu.memory_space<vmem>>, vector<1x1xf32>
      tpu.vector_store %arg11[%c0_10, %c0_11], %24 {strides = array<i32>} : memref<1x1xf32, #tpu.memory_space<vmem>>, vector<1x1xf32>,
      %cst_12 = arith.constant 0.000000e+00 : f32
      %26 = vector.broadcast %cst_12 : f32 to vector<1x1xf32>
      %c0_13 = arith.constant 0 : index
      %c0_14 = arith.constant 0 : index
      %27 = vector.load %arg12[%c0_13, %c0_14] : memref<1x1xf32, #tpu.memory_space<vmem>>, vector<1x1xf32>
      tpu.vector_store %arg12[%c0_13, %c0_14], %26 {strides = array<i32>} : memref<1x1xf32, #tpu.memory_space<vmem>>, vector<1x1xf32>,
      %cst_15 = arith.constant 0.000000e+00 : f32
      %28 = vector.broadcast %cst_15 : f32 to vector<1x256xf32>
      %c0_16 = arith.constant 0 : index
      %c0_17 = arith.constant 0 : index
      %29 = vector.load %arg13[%c0_16, %c0_17] : memref<1x256xf32, #tpu.memory_space<vmem>>, vector<1x256xf32>
      tpu.vector_store %arg13[%c0_16, %c0_17], %28 {strides = array<i32>} : memref<1x256xf32, #tpu.memory_space<vmem>>, vector<1x256xf32>,
    } else {
    }
    %c0_i32_3 = arith.constant 0 : i32
    %16 = arith.cmpi eq, %arg0, %c0_i32_3 : i32
    %17 = arith.extui %16 : i1 to i32
    %c0_i32_4 = arith.constant 0 : i32
    %18 = arith.cmpi ne, %17, %c0_i32_4 : i32
    scf.if %18 {
      %c0_6 = arith.constant 0 : index
      %c0_7 = arith.constant 0 : index
      %22 = vector.load %arg8[%c0_6, %c0_7] : memref<1x256xf32, #tpu.memory_space<vmem>>, vector<1x256xf32>
      %cst_8 = arith.constant dense<0.000000e+00> : vector<256xf32>
      %23 = vector.multi_reduction <add>, %10, %cst_8 [0] : vector<16x256xf32> to vector<256xf32>
      %24 = vector.shape_cast %23 : vector<256xf32> to vector<1x256xf32>
      %25 = arith.addf %22, %24 : vector<1x256xf32>
      %c0_9 = arith.constant 0 : index
      %c0_10 = arith.constant 0 : index
      %26 = vector.load %arg8[%c0_9, %c0_10] : memref<1x256xf32, #tpu.memory_space<vmem>>, vector<1x256xf32>
      tpu.vector_store %arg8[%c0_9, %c0_10], %25 {strides = array<i32>} : memref<1x256xf32, #tpu.memory_space<vmem>>, vector<1x256xf32>,
    } else {
    }
    %c1_i32 = arith.constant 1 : i32
    %19 = arith.cmpi eq, %arg0, %c1_i32 : i32
    %20 = arith.extui %19 : i1 to i32
    %c0_i32_5 = arith.constant 0 : i32
    %21 = arith.cmpi ne, %20, %c0_i32_5 : i32
    scf.if %21 {
      %c0_i32_6 = arith.constant 0 : i32
      %22 = arith.cmpi eq, %arg1, %c0_i32_6 : i32
      %23 = arith.extui %22 : i1 to i32
      %c0_i32_7 = arith.constant 0 : i32
      %24 = arith.cmpi ne, %23, %c0_i32_7 : i32
      scf.if %24 {
        %c0_32 = arith.constant 0 : index
        %c0_33 = arith.constant 0 : index
        %64 = vector.load %arg8[%c0_32, %c0_33] : memref<1x256xf32, #tpu.memory_space<vmem>>, vector<1x256xf32>
        %c0_34 = arith.constant 0 : index
        %c0_35 = arith.constant 0 : index
        %65 = vector.load %arg5[%c0_34, %c0_35] : memref<256x32xf32, #tpu.memory_space<vmem>>, vector<256x32xf32>
        %cst_36 = arith.constant dense<0.000000e+00> : vector<1x32xf32>
        %66 = tpu.matmul %64, %65, %cst_36 {dimension_numbers = #tpu.dot_dimension_numbers<[1], [0], [0], [1], [0, 0, 1, 1], [], []>} : vector<1x256xf32>, vector<256x32xf32>, vector<1x32xf32> -> vector<1x32xf32>
        %c0_37 = arith.constant 0 : index
        %c0_38 = arith.constant 0 : index
        %67 = vector.load %arg6[%c0_37, %c0_38] : memref<1x32xf32, #tpu.memory_space<vmem>>, vector<1x32xf32>
        %cst_39 = arith.constant 6.400000e+01 : f32
        %68 = vector.broadcast %cst_39 : f32 to vector<1x32xf32>
        %69 = arith.mulf %68, %67 : vector<1x32xf32>
        %70 = arith.addf %66, %69 : vector<1x32xf32>
        %c0_40 = arith.constant 0 : index
        %c0_41 = arith.constant 0 : index
        %71 = vector.load %arg3[%c0_40, %c0_41] : memref<256x32xf32, #tpu.memory_space<vmem>>, vector<256x32xf32>
        %cst_42 = arith.constant dense<0.000000e+00> : vector<1x256xf32>
        %72 = tpu.matmul %70, %71, %cst_42 {dimension_numbers = #tpu.dot_dimension_numbers<[1], [1], [0], [0], [0, 0, 1, 0], [], []>} : vector<1x32xf32>, vector<256x32xf32>, vector<1x256xf32> -> vector<1x256xf32>
        %c0_43 = arith.constant 0 : index
        %c0_44 = arith.constant 0 : index
        %73 = vector.load %arg9[%c0_43, %c0_44] : memref<1x256xf32, #tpu.memory_space<vmem>>, vector<1x256xf32>
        tpu.vector_store %arg9[%c0_43, %c0_44], %72 {strides = array<i32>} : memref<1x256xf32, #tpu.memory_space<vmem>>, vector<1x256xf32>,
        %c0_45 = arith.constant 0 : index
        %c0_46 = arith.constant 0 : index
        %74 = vector.load %arg4[%c0_45, %c0_46] : memref<1x32xf32, #tpu.memory_space<vmem>>, vector<1x32xf32>
        %75 = arith.mulf %74, %70 : vector<1x32xf32>
        %cst_47 = arith.constant dense<0.000000e+00> : vector<1xf32>
        %76 = vector.multi_reduction <add>, %75, %cst_47 [1] : vector<1x32xf32> to vector<1xf32>
        %77 = vector.shape_cast %76 : vector<1xf32> to vector<1x1xf32>
        %c0_48 = arith.constant 0 : index
        %c0_49 = arith.constant 0 : index
        %78 = vector.load %arg10[%c0_48, %c0_49] : memref<1x1xf32, #tpu.memory_space<vmem>>, vector<1x1xf32>
        tpu.vector_store %arg10[%c0_48, %c0_49], %77 {strides = array<i32>} : memref<1x1xf32, #tpu.memory_space<vmem>>, vector<1x1xf32>,
      } else {
      }
      %c0_8 = arith.constant 0 : index
      %c0_9 = arith.constant 0 : index
      %25 = vector.load %arg9[%c0_8, %c0_9] : memref<1x256xf32, #tpu.memory_space<vmem>>, vector<1x256xf32>
      %26 = vector.broadcast %25 : vector<1x256xf32> to vector<16x256xf32>
      %27 = arith.mulf %10, %26 : vector<16x256xf32>
      %cst_10 = arith.constant dense<0.000000e+00> : vector<16xf32>
      %28 = vector.multi_reduction <add>, %27, %cst_10 [1] : vector<16x256xf32> to vector<16xf32>
      %29 = vector.shape_cast %28 : vector<16xf32> to vector<16x1xf32>
      %c0_11 = arith.constant 0 : index
      %c0_12 = arith.constant 0 : index
      %30 = vector.load %arg10[%c0_11, %c0_12] : memref<1x1xf32, #tpu.memory_space<vmem>>, vector<1x1xf32>
      %31 = vector.broadcast %30 : vector<1x1xf32> to vector<16x1xf32>
      %32 = arith.addf %29, %31 : vector<16x1xf32>
      %cst_13 = arith.constant 0xFF800000 : f32
      %33 = vector.broadcast %cst_13 : f32 to vector<16x1xf32>
      %34 = arith.select %5, %32, %33 : vector<16x1xi1>, vector<16x1xf32>
      %c0_14 = arith.constant 0 : index
      %c0_15 = arith.constant 0 : index
      %35 = vector.load %arg11[%c0_14, %c0_15] : memref<1x1xf32, #tpu.memory_space<vmem>>, vector<1x1xf32>
      %cst_16 = arith.constant dense<0xFF800000> : vector<1xf32>
      %36 = vector.multi_reduction <maximumf>, %34, %cst_16 [0] : vector<16x1xf32> to vector<1xf32>
      %37 = vector.shape_cast %36 : vector<1xf32> to vector<1x1xf32>
      %38 = arith.maximumf %35, %37 : vector<1x1xf32>
      %c0_17 = arith.constant 0 : index
      %c0_18 = arith.constant 0 : index
      %39 = vector.load %arg11[%c0_17, %c0_18] : memref<1x1xf32, #tpu.memory_space<vmem>>, vector<1x1xf32>
      %40 = arith.subf %39, %38 : vector<1x1xf32>
      %41 = math.exp %40 : vector<1x1xf32>
      %42 = vector.broadcast %38 : vector<1x1xf32> to vector<16x1xf32>
      %43 = arith.subf %34, %42 : vector<16x1xf32>
      %44 = math.exp %43 : vector<16x1xf32>
      %c0_19 = arith.constant 0 : index
      %c0_20 = arith.constant 0 : index
      %45 = vector.load %arg12[%c0_19, %c0_20] : memref<1x1xf32, #tpu.memory_space<vmem>>, vector<1x1xf32>
      %46 = arith.mulf %41, %45 : vector<1x1xf32>
      %cst_21 = arith.constant dense<0.000000e+00> : vector<1xf32>
      %47 = vector.multi_reduction <add>, %44, %cst_21 [0] : vector<16x1xf32> to vector<1xf32>
      %48 = vector.shape_cast %47 : vector<1xf32> to vector<1x1xf32>
      %49 = arith.addf %46, %48 : vector<1x1xf32>
      %c0_22 = arith.constant 0 : index
      %c0_23 = arith.constant 0 : index
      %50 = vector.load %arg12[%c0_22, %c0_23] : memref<1x1xf32, #tpu.memory_space<vmem>>, vector<1x1xf32>
      tpu.vector_store %arg12[%c0_22, %c0_23], %49 {strides = array<i32>} : memref<1x1xf32, #tpu.memory_space<vmem>>, vector<1x1xf32>,
      %c0_24 = arith.constant 0 : index
      %c0_25 = arith.constant 0 : index
      %51 = vector.load %arg13[%c0_24, %c0_25] : memref<1x256xf32, #tpu.memory_space<vmem>>, vector<1x256xf32>
      %52 = vector.broadcast %41 : vector<1x1xf32> to vector<1x256xf32>
      %53 = arith.mulf %52, %51 : vector<1x256xf32>
      %54 = vector.broadcast %44 : vector<16x1xf32> to vector<16x256xf32>
      %55 = arith.mulf %54, %10 : vector<16x256xf32>
      %cst_26 = arith.constant dense<0.000000e+00> : vector<256xf32>
      %56 = vector.multi_reduction <add>, %55, %cst_26 [0] : vector<16x256xf32> to vector<256xf32>
      %57 = vector.shape_cast %56 : vector<256xf32> to vector<1x256xf32>
      %58 = arith.addf %53, %57 : vector<1x256xf32>
      %c0_27 = arith.constant 0 : index
      %c0_28 = arith.constant 0 : index
      %59 = vector.load %arg13[%c0_27, %c0_28] : memref<1x256xf32, #tpu.memory_space<vmem>>, vector<1x256xf32>
      tpu.vector_store %arg13[%c0_27, %c0_28], %58 {strides = array<i32>} : memref<1x256xf32, #tpu.memory_space<vmem>>, vector<1x256xf32>,
      %c0_29 = arith.constant 0 : index
      %c0_30 = arith.constant 0 : index
      %60 = vector.load %arg11[%c0_29, %c0_30] : memref<1x1xf32, #tpu.memory_space<vmem>>, vector<1x1xf32>
      tpu.vector_store %arg11[%c0_29, %c0_30], %38 {strides = array<i32>} : memref<1x1xf32, #tpu.memory_space<vmem>>, vector<1x1xf32>,
      %c3_i32 = arith.constant 3 : i32
      %61 = arith.cmpi eq, %arg1, %c3_i32 : i32
      %62 = arith.extui %61 : i1 to i32
      %c0_i32_31 = arith.constant 0 : i32
      %63 = arith.cmpi ne, %62, %c0_i32_31 : i32
      scf.if %63 {
        %c0_32 = arith.constant 0 : index
        %c0_33 = arith.constant 0 : index
        %64 = vector.load %arg13[%c0_32, %c0_33] : memref<1x256xf32, #tpu.memory_space<vmem>>, vector<1x256xf32>
        %c0_34 = arith.constant 0 : index
        %c0_35 = arith.constant 0 : index
        %65 = vector.load %arg12[%c0_34, %c0_35] : memref<1x1xf32, #tpu.memory_space<vmem>>, vector<1x1xf32>
        %66 = tpu.reciprocal %65 {approx = true} : vector<1x1xf32> -> vector<1x1xf32>
        %67 = vector.broadcast %66 : vector<1x1xf32> to vector<1x256xf32>
        %68 = arith.mulf %64, %67 : vector<1x256xf32>
        %c0_36 = arith.constant 0 : index
        %c0_37 = arith.constant 0 : index
        %69 = vector.load %arg7[%c0_36, %c0_37] : memref<1x256xf32, #tpu.memory_space<vmem>>, vector<1x256xf32>
        tpu.vector_store %arg7[%c0_36, %c0_37], %68 {strides = array<i32>} : memref<1x256xf32, #tpu.memory_space<vmem>>, vector<1x256xf32>,
      } else {
      }
    } else {
    }
    return
  }
  func.func @transform_0(%arg0: i32, %arg1: i32) -> (i32, i32) {
    %c0_i32 = arith.constant 0 : i32
    %c0_i32_0 = arith.constant 0 : i32
    return %arg1, %c0_i32 : i32, i32
  }
  func.func @transform_1(%arg0: i32, %arg1: i32) -> (i32, i32) {
    %c0_i32 = arith.constant 0 : i32
    %c0_i32_0 = arith.constant 0 : i32
    %c0_i32_1 = arith.constant 0 : i32
    return %c0_i32, %c0_i32_0 : i32, i32
  }
  func.func @transform_2(%arg0: i32, %arg1: i32) -> (i32, i32) {
    %c0_i32 = arith.constant 0 : i32
    %c0_i32_0 = arith.constant 0 : i32
    %c0_i32_1 = arith.constant 0 : i32
    return %c0_i32, %c0_i32_0 : i32, i32
  }
  func.func @transform_3(%arg0: i32, %arg1: i32) -> (i32, i32) {
    %c0_i32 = arith.constant 0 : i32
    %c0_i32_0 = arith.constant 0 : i32
    %c0_i32_1 = arith.constant 0 : i32
    return %c0_i32, %c0_i32_0 : i32, i32
  }
  func.func @transform_4(%arg0: i32, %arg1: i32) -> (i32, i32) {
    %c0_i32 = arith.constant 0 : i32
    %c0_i32_0 = arith.constant 0 : i32
    %c0_i32_1 = arith.constant 0 : i32
    return %c0_i32, %c0_i32_0 : i32, i32
  }
  func.func @transform_5(%arg0: i32, %arg1: i32) -> (i32, i32) {
    %c0_i32 = arith.constant 0 : i32
    %c0_i32_0 = arith.constant 0 : i32
    %c0_i32_1 = arith.constant 0 : i32
    return %c0_i32, %c0_i32_0 : i32, i32
  }
}

</mosaic_0001>

<llo_original>
// kernel: tpu_custom_call.1
$region0: #{tpu_custom_call.1}
  #allocation0 [shape = 'u32[]', space=smem, size = 0x4, offset = 0x4, fixed_abs, tag = 'smem constant byte address 0x4 - core index']
  #allocation1 [shape = 'u32[144,128]{1,0:T(1,128)}', space=vmem, size = 0x12000, scoped, tag = 'internal scratch']
  #allocation2 [shape = 'f32[1,256]{1,0:T(1,128)}', space=vmem, size = 0x400, scoped, tag = 'scratch operand']
  #allocation3 [shape = 'f32[1,256]{1,0:T(1,128)}', space=vmem, size = 0x400, scoped, tag = 'scratch operand']
  #allocation4 [shape = 'f32[1,1]{1,0:T(1,128)}', space=vmem, size = 0x200, scoped, tag = 'scratch operand']
  #allocation5 [shape = 'f32[1,1]{1,0:T(1,128)}', space=vmem, size = 0x200, scoped, tag = 'scratch operand']
  #allocation6 [shape = 'f32[1,1]{1,0:T(1,128)}', space=vmem, size = 0x200, scoped, tag = 'scratch operand']
  #allocation7 [shape = 'f32[1,256]{1,0:T(1,128)}', space=vmem, size = 0x400, scoped, tag = 'scratch operand']
  %s0 = inlined_call_operand.vmem [shape: f32[64,256], index: 0, kind: input, shape index: {}]
  %s1 = inlined_call_operand.vmem [shape: f32[256,32], index: 1, kind: input, shape index: {}]
  %s2 = inlined_call_operand.vmem [shape: f32[1,32], index: 2, kind: input, shape index: {}]
  %s3 = inlined_call_operand.vmem [shape: f32[256,32], index: 3, kind: input, shape index: {}]
  %s4 = inlined_call_operand.vmem [shape: f32[1,32], index: 4, kind: input, shape index: {}]
  %s5 = inlined_call_operand.hbm [shape: f32[1,256], index: 5, kind: output, shape index: {}]
  %s6 = sld [smem:[#allocation0]]
  $region73: #{tpu_custom_call.1} parent=0
    _
  %s8 = ssub.s32 1, %s6
  %s9 = scalar_select 0, %s8, %s6
  $region1: #{tpu_custom_call.1} parent=0
    #allocation8 [shape = 'u8[1024]{0}', space=vmem, size = 0x400, scoped, tag = 'output window, operand 0, single buffered']
    #allocation9 [shape = 's32[2]{0}', space=sflag, size = 0x8, scoped, tag = 'scoped memory for tpu_custom_call.1']
    %10 = vsyncpa [#allocation9], 0
    loop: start=0, step=1, limit=10
    $region2: #{tpu_custom_call.1} parent=1 // loop_pre_header
      _
    $region3: #{tpu_custom_call.1} parent=1 // loop_header
      %s12 = sphi 0, %s16
      %p13 = scmp.ge.s32.totalorder %s12, 10
      %s19 = sphi 0, %s31
      %s20 = sphi 0, %s27
      %s21 = sphi 0, %s19
      %s22 = sphi 0, %s20
      %s23 = sphi 0, %s21
      %s24 = sphi 0, %s22
      %s34 = sphi 0, %s36
      %s37 = sphi 0, %s34
      %s38 = sphi 0, %s37
      %s54 = sphi 0, %s38
      %s58 = sphi 0, %s58
      %s60 = sphi 0, %s58
      %s61 = sphi 0, %s60
      %s75 = sphi 0, %s61
      %s79 = sphi 0, %s79
      %s81 = sphi 0, %s79
      %s82 = sphi 0, %s81
      %s96 = sphi 0, %s82
      %s100 = sphi 0, %s100
      %s102 = sphi 0, %s100
      %s103 = sphi 0, %s102
      %s117 = sphi 0, %s103
      %s121 = sphi 0, %s121
      %s123 = sphi 0, %s121
      %s124 = sphi 0, %s123
      %s138 = sphi 0, %s124
      %s142 = sphi 0, %s142
      %s144 = sphi 0, %s142
      %s145 = sphi 0, %s144
      %s159 = sphi 0, %s145
    $region4: #{tpu_custom_call.1} parent=1 // loop_header_branch
      %15 = sbr.rel (%p13) target = $region8
    $region5: #{tpu_custom_call.1} parent=1 // loop_body
      %s17 = ssub.s32 %s12, 1
      %s18 = ssub.s32 %s12, 2
      %s25 = sadd.s32 1, %s20
      %p26 = scmp.ge.s32.totalorder %s25, 4
      %s27 = scalar_select %p26, 0, %s25
      %s28 = sadd.s32 1, %s19
      %s29 = scalar_select %p26, %s28, %s19
      %p30 = scmp.ge.s32.totalorder %s29, 2
      %s31 = scalar_select %p30, 0, %s29
      %s32 = ssub.s32 %s20, %s27
      %p33 = scmp.eq.s32.totalorder %s32, 0
      %s35 = sadd.s32 %s34, 1
      %s36 = scalar_select %p33, %s34, %s35
      %p39 = pneg %p33
      %p40 = scmp.eq.s32.totalorder %s12, 7
      %p41 = por %p39, %p40
      %p42 = scmp.ne.s32.totalorder %s34, %s37
      %p43 = scmp.eq.s32.totalorder %s12, 0
      %p44 = por %p42, %p43
      %p45 = scmp.ne.s32.totalorder %s34, %s37
      %p46 = scmp.eq.s32.totalorder %s17, 7
      %p47 = por %p45, %p46
      %p48 = scmp.ne.s32.totalorder %s37, %s38
      %p49 = scmp.eq.s32.totalorder %s17, 0
      %p50 = por %p48, %p49
      %p51 = scmp.ne.s32.totalorder %s37, %s38
      %p52 = scmp.eq.s32.totalorder %s18, 7
      %p53 = por %p51, %p52
      %p55 = scmp.ne.s32.totalorder %s38, %s54
      %p56 = scmp.eq.s32.totalorder %s18, 0
      %p57 = por %p55, %p56
      %s59 = sadd.s32 %s58, 1
      %p62 = scmp.eq.s32.totalorder %s12, 7
      %p63 = scmp.ne.s32.totalorder %s58, %s60
      %p64 = scmp.eq.s32.totalorder %s12, 0
      %p65 = por %p63, %p64
      %p66 = scmp.ne.s32.totalorder %s58, %s60
      %p67 = scmp.eq.s32.totalorder %s17, 7
      %p68 = por %p66, %p67
      %p69 = scmp.ne.s32.totalorder %s60, %s61
      %p70 = scmp.eq.s32.totalorder %s17, 0
      %p71 = por %p69, %p70
      %p72 = scmp.ne.s32.totalorder %s60, %s61
      %p73 = scmp.eq.s32.totalorder %s18, 7
      %p74 = por %p72, %p73
      %p76 = scmp.ne.s32.totalorder %s61, %s75
      %p77 = scmp.eq.s32.totalorder %s18, 0
      %p78 = por %p76, %p77
      %s80 = sadd.s32 %s79, 1
      %p83 = scmp.eq.s32.totalorder %s12, 7
      %p84 = scmp.ne.s32.totalorder %s79, %s81
      %p85 = scmp.eq.s32.totalorder %s12, 0
      %p86 = por %p84, %p85
      %p87 = scmp.ne.s32.totalorder %s79, %s81
      %p88 = scmp.eq.s32.totalorder %s17, 7
      %p89 = por %p87, %p88
      %p90 = scmp.ne.s32.totalorder %s81, %s82
      %p91 = scmp.eq.s32.totalorder %s17, 0
      %p92 = por %p90, %p91
      %p93 = scmp.ne.s32.totalorder %s81, %s82
      %p94 = scmp.eq.s32.totalorder %s18, 7
      %p95 = por %p93, %p94
      %p97 = scmp.ne.s32.totalorder %s82, %s96
      %p98 = scmp.eq.s32.totalorder %s18, 0
      %p99 = por %p97, %p98
      %s101 = sadd.s32 %s100, 1
      %p104 = scmp.eq.s32.totalorder %s12, 7
      %p105 = scmp.ne.s32.totalorder %s100, %s102
      %p106 = scmp.eq.s32.totalorder %s12, 0
      %p107 = por %p105, %p106
      %p108 = scmp.ne.s32.totalorder %s100, %s102
      %p109 = scmp.eq.s32.totalorder %s17, 7
      %p110 = por %p108, %p109
      %p111 = scmp.ne.s32.totalorder %s102, %s103
      %p112 = scmp.eq.s32.totalorder %s17, 0
      %p113 = por %p111, %p112
      %p114 = scmp.ne.s32.totalorder %s102, %s103
      %p115 = scmp.eq.s32.totalorder %s18, 7
      %p116 = por %p114, %p115
      %p118 = scmp.ne.s32.totalorder %s103, %s117
      %p119 = scmp.eq.s32.totalorder %s18, 0
      %p120 = por %p118, %p119
      %s122 = sadd.s32 %s121, 1
      %p125 = scmp.eq.s32.totalorder %s12, 7
      %p126 = scmp.ne.s32.totalorder %s121, %s123
      %p127 = scmp.eq.s32.totalorder %s12, 0
      %p128 = por %p126, %p127
      %p129 = scmp.ne.s32.totalorder %s121, %s123
      %p130 = scmp.eq.s32.totalorder %s17, 7
      %p131 = por %p129, %p130
      %p132 = scmp.ne.s32.totalorder %s123, %s124
      %p133 = scmp.eq.s32.totalorder %s17, 0
      %p134 = por %p132, %p133
      %p135 = scmp.ne.s32.totalorder %s123, %s124
      %p136 = scmp.eq.s32.totalorder %s18, 7
      %p137 = por %p135, %p136
      %p139 = scmp.ne.s32.totalorder %s124, %s138
      %p140 = scmp.eq.s32.totalorder %s18, 0
      %p141 = por %p139, %p140
      %s143 = sadd.s32 %s142, 1
      %p146 = scmp.eq.s32.totalorder %s12, 7
      %p147 = scmp.ne.s32.totalorder %s142, %s144
      %p148 = scmp.eq.s32.totalorder %s12, 0
      %p149 = por %p147, %p148
      %p150 = scmp.ne.s32.totalorder %s142, %s144
      %p151 = scmp.eq.s32.totalorder %s17, 7
      %p152 = por %p150, %p151
      %p153 = scmp.ne.s32.totalorder %s144, %s145
      %p154 = scmp.eq.s32.totalorder %s17, 0
      %p155 = por %p153, %p154
      %p156 = scmp.ne.s32.totalorder %s144, %s145
      %p157 = scmp.eq.s32.totalorder %s18, 7
      %p158 = por %p156, %p157
      %p160 = scmp.ne.s32.totalorder %s145, %s159
      %p161 = scmp.eq.s32.totalorder %s18, 0
      %p162 = por %p160, %p161
      %p163 = scmp.le.s32.totalorder 1, %s12
      %p164 = scmp.lt.s32.totalorder %s12, 9
      %p165 = pnand %p163, %p164
      %p166 = pneg %p165
      // Predicated region
      $region9: #{tpu_custom_call.1} parent=5 // pred_check
        _
      $region10: #{tpu_custom_call.1} parent=5 // pred_check_branch
        %168 = sbr.rel (%p165) target = $region12
      $region11: #{tpu_custom_call.1} parent=5 // pred_region
        %s169 = ssub.s32 %s12, 1
        // Predicated region
        $region13: #{tpu_custom_call.1} parent=11 // pred_check
          %p170 = pneg %p71
        $region14: #{tpu_custom_call.1} parent=11 // pred_check_branch
          %172 = sbr.rel (%p170) target = $region16
        $region15: #{tpu_custom_call.1} parent=11 // pred_region
          _
        $region16: #{tpu_custom_call.1} parent=11 // pred_fallthru
          _
        // Predicated region
        $region17: #{tpu_custom_call.1} parent=11 // pred_check
          %p173 = pneg %p92
        $region18: #{tpu_custom_call.1} parent=11 // pred_check_branch
          %175 = sbr.rel (%p173) target = $region20
        $region19: #{tpu_custom_call.1} parent=11 // pred_region
          _
        $region20: #{tpu_custom_call.1} parent=11 // pred_fallthru
          _
        // Predicated region
        $region21: #{tpu_custom_call.1} parent=11 // pred_check
          %p176 = pneg %p113
        $region22: #{tpu_custom_call.1} parent=11 // pred_check_branch
          %178 = sbr.rel (%p176) target = $region24
        $region23: #{tpu_custom_call.1} parent=11 // pred_region
          _
        $region24: #{tpu_custom_call.1} parent=11 // pred_fallthru
          _
        // Predicated region
        $region25: #{tpu_custom_call.1} parent=11 // pred_check
          %p179 = pneg %p134
        $region26: #{tpu_custom_call.1} parent=11 // pred_check_branch
          %181 = sbr.rel (%p179) target = $region28
        $region27: #{tpu_custom_call.1} parent=11 // pred_region
          _
        $region28: #{tpu_custom_call.1} parent=11 // pred_fallthru
          _
      $region12: #{tpu_custom_call.1} parent=5 // pred_fallthru
        _
      %p182 = scmp.lt.s32.totalorder %s12, 8
      // Predicated region
      $region29: #{tpu_custom_call.1} parent=5 // pred_check
        %p183 = pneg %p182
      $region30: #{tpu_custom_call.1} parent=5 // pred_check_branch
        %185 = sbr.rel (%p183) target = $region32
      $region31: #{tpu_custom_call.1} parent=5 // pred_region
        // Predicated region
        $region33: #{tpu_custom_call.1} parent=31 // pred_check
          %p186 = pneg %p44
        $region34: #{tpu_custom_call.1} parent=31 // pred_check_branch
          %188 = sbr.rel (%p186) target = $region36
        $region35: #{tpu_custom_call.1} parent=31 // pred_region
          %s189 = smul.u32 2, %s20
          %p190 = scmp.lt.s32.totalorder %s189, 7
          %s191 = scalar_select %p190, %s189, 7
          %s192 = smul.addr %s191, 2
          %s193 = smul.addr %s192, 8
          %s194 = scalar_lea.vmem %s0, %s193
          %s195 = smul.u32 2, %s20
        $region36: #{tpu_custom_call.1} parent=31 // pred_fallthru
          _
      $region32: #{tpu_custom_call.1} parent=5 // pred_fallthru
        _
      %p196 = scmp.le.s32.totalorder 1, %s12
      %p197 = scmp.lt.s32.totalorder %s12, 9
      %p198 = pnand %p196, %p197
      %p199 = pneg %p198
      // Predicated region
      $region37: #{tpu_custom_call.1} parent=5 // pred_check
        _
      $region38: #{tpu_custom_call.1} parent=5 // pred_check_branch
        %201 = sbr.rel (%p198) target = $region40
      $region39: #{tpu_custom_call.1} parent=5 // pred_region
        %s202 = ssub.s32 %s12, 1
        %s203 = smul.u32 2, %s22
        %p204 = scmp.lt.s32.totalorder %s203, 7
        %s205 = scalar_select %p204, %s203, 7
        %s206 = smul.addr %s205, 2
        %s207 = smul.addr %s206, 8
        %s208 = scalar_lea.vmem %s0, %s207
        %p209 = pneg %p50
        %p210 = pneg %p47
        %p211 = pneg %p71
        %p212 = pneg %p68
        %p213 = pneg %p92
        %p214 = pneg %p89
        %p215 = pneg %p113
        %p216 = pneg %p110
        %p217 = pneg %p134
        %p218 = pneg %p131
        %p219 = pneg %p155
        %p220 = pneg %p152
        %s221 = smul.u32 2, %s22
        %p222 = scmp.lt.s32.totalorder %s221, 7
        %s223 = scalar_select %p222, %s221, 7
        %s224 = smul.addr %s223, 2
        %s225 = smul.addr %s224, 8
        %s226 = scalar_lea.vmem %s0, %s225
        %s227 = smul.u32 2, %s22
        %s228 = smul.u32 %s22, 16
        %v229 = vlaneseq
        %v230 = vshrl.u32 %v229, 7
        %v231 = vadd.s32 %v230, 8
        %v232 = vstv %s228
        %v233 = vadd.s32 %v232, %v230
        %v234 = vadd.s32 %v232, %v231
        %vm235 = vcmp.lt.s32.totalorder %v233, 64
        %vm236 = vcmp.lt.s32.totalorder %v234, 64
        %v237 = vld [vmem:[%s226] sm:$0xff]
        %v238 = vld [vmem:[%s226 + $0x8] sm:$0xff]
        %v239 = vld [vmem:[%s226 + $0x10] sm:$0xff]
        %v240 = vld [vmem:[%s226 + $0x18] sm:$0xff]
        %v241 = vsel %vm235, 1, 0
        %v242 = vsel %vm236, 1, 0
        %vm243 = vcmp.eq.s32.totalorder %v241, 1
        %vm244 = vcmp.eq.s32.totalorder %v242, 1
        %v245 = vsel %vm243, %v237, 0.0
        %v246 = vsel %vm243, %v238, 0.0
        %v247 = vsel %vm244, %v239, 0.0
        %v248 = vsel %vm244, %v240, 0.0
        %p249 = scmp.eq.s32.totalorder %s21, 0
        %p250 = scmp.eq.s32.totalorder %s22, 0
        %p251 = pnand %p249, %p250
        %p252 = pneg %p251
        // Predicated region
        $region41: #{tpu_custom_call.1} parent=39 // pred_check
          _
        $region42: #{tpu_custom_call.1} parent=39 // pred_check_branch
          %254 = sbr.rel (%p251) target = $region44
        $region43: #{tpu_custom_call.1} parent=39 // pred_region
          %v255 = vlaneseq
          %vm256 = vcmp.ge.s32.totalorder %v255, 0
          %vm257 = vcmp.lt.s32.totalorder %v255, 256
          %vm258 = vmand %vm256, %vm257
          %259 = vst.msk [vmem:[#allocation2] sm:$0x3] %vm258, 0.0
          %vm260 = vcmask 0
          %261 = vst.msk [vmem:[#allocation5] sm:$0x1] %vm260, -inf
          %262 = vst.msk [vmem:[#allocation6] sm:$0x1] %vm260, 0.0
          %263 = vst.msk [vmem:[#allocation7] sm:$0x3] %vm258, 0.0
        $region44: #{tpu_custom_call.1} parent=39 // pred_fallthru
          _
        // Predicated region
        $region45: #{tpu_custom_call.1} parent=39 // pred_check
          %p264 = pneg %p249
        $region46: #{tpu_custom_call.1} parent=39 // pred_check_branch
          %266 = sbr.rel (%p264) target = $region48
        $region47: #{tpu_custom_call.1} parent=39 // pred_region
          %v267 = vld [vmem:[#allocation2] sm:$0x3]
          %v268 = vadd.f32 %v245, %v247
          %v269 = vrot.slane %v268, 4
          %v270 = vadd.f32 %v268, %v269
          %v271 = vrot.slane %v270, 2
          %v272 = vadd.f32 %v270, %v271
          %v273 = vrot.slane %v272, 1
          %v274 = vadd.f32 %v272, %v273
          %v275 = vadd.f32 %v246, %v248
          %v276 = vrot.slane %v275, 4
          %v277 = vadd.f32 %v275, %v276
          %v278 = vrot.slane %v277, 2
          %v279 = vadd.f32 %v277, %v278
          %v280 = vrot.slane %v279, 1
          %v281 = vadd.f32 %v279, %v280
          %v284 = vcombine.low %v274, %v281
          %v286 = vunpack.c.l.s4 1966171168
          %v287 = vunpack.c.0.s8 %v286
          %v288 = vlaneseq
          %v289 = vshrl.u32 %v288, 7
          %v290 = vsub.s32 %v287, %v289
          %v291 = vrot.slane %v284, %v290
          %v293 = vunpack.c.l.s4 1966171168
          %v294 = vunpack.c.0.s8 %v293
          %v295 = vlaneseq
          %v296 = vshrl.u32 %v295, 7
          %v297 = vsub.s32 %v294, %v296
          %v298 = vrot.slane %v291, %v297
          %v300 = vadd.f32 %v267, %v298
          %v301 = vlaneseq
          %vm302 = vcmp.ge.s32.totalorder %v301, 0
          %vm303 = vcmp.lt.s32.totalorder %v301, 256
          %vm304 = vmand %vm302, %vm303
          %305 = vst.msk [vmem:[#allocation2] sm:$0x3] %vm304, %v300
        $region48: #{tpu_custom_call.1} parent=39 // pred_fallthru
          _
        %p306 = scmp.eq.s32.totalorder %s21, 1
        // Predicated region
        $region49: #{tpu_custom_call.1} parent=39 // pred_check
          %p307 = pneg %p306
        $region50: #{tpu_custom_call.1} parent=39 // pred_check_branch
          %309 = sbr.rel (%p307) target = $region52
        $region51: #{tpu_custom_call.1} parent=39 // pred_region
          // Predicated region
          $region53: #{tpu_custom_call.1} parent=51 // pred_check
            %p310 = pneg %p250
          $region54: #{tpu_custom_call.1} parent=51 // pred_check_branch
            %312 = sbr.rel (%p310) target = $region56
          $region55: #{tpu_custom_call.1} parent=51 // pred_region
            %v313 = vld [vmem:[#allocation2] sm:$0x3]
            %v314 = vld [vmem:[%s3] sm:$0xff]
            %v315 = vld [vmem:[%s3 + $0x8] sm:$0xff]
            %v316 = vld [vmem:[%s3 + $0x10] sm:$0xff]
            %v317 = vld [vmem:[%s3 + $0x18] sm:$0xff]
            %v318 = vld [vmem:[%s3 + $0x20] sm:$0xff]
            %v319 = vld [vmem:[%s3 + $0x28] sm:$0xff]
            %v320 = vld [vmem:[%s3 + $0x30] sm:$0xff]
            %v321 = vld [vmem:[%s3 + $0x38] sm:$0xff]
            %v322 = vld [vmem:[%s3 + $0x40] sm:$0xff]
            %v323 = vld [vmem:[%s3 + $0x48] sm:$0xff]
            %v324 = vld [vmem:[%s3 + $0x50] sm:$0xff]
            %v325 = vld [vmem:[%s3 + $0x58] sm:$0xff]
            %v326 = vld [vmem:[%s3 + $0x60] sm:$0xff]
            %v327 = vld [vmem:[%s3 + $0x68] sm:$0xff]
            %v328 = vld [vmem:[%s3 + $0x70] sm:$0xff]
            %v329 = vld [vmem:[%s3 + $0x78] sm:$0xff]
            %v330 = vld [vmem:[%s3 + $0x80] sm:$0xff]
            %v331 = vld [vmem:[%s3 + $0x88] sm:$0xff]
            %v332 = vld [vmem:[%s3 + $0x90] sm:$0xff]
            %v333 = vld [vmem:[%s3 + $0x98] sm:$0xff]
            %v334 = vld [vmem:[%s3 + $0xa0] sm:$0xff]
            %v335 = vld [vmem:[%s3 + $0xa8] sm:$0xff]
            %v336 = vld [vmem:[%s3 + $0xb0] sm:$0xff]
            %v337 = vld [vmem:[%s3 + $0xb8] sm:$0xff]
            %v338 = vld [vmem:[%s3 + $0xc0] sm:$0xff]
            %v339 = vld [vmem:[%s3 + $0xc8] sm:$0xff]
            %v340 = vld [vmem:[%s3 + $0xd0] sm:$0xff]
            %v341 = vld [vmem:[%s3 + $0xd8] sm:$0xff]
            %v342 = vld [vmem:[%s3 + $0xe0] sm:$0xff]
            %v343 = vld [vmem:[%s3 + $0xe8] sm:$0xff]
            %v344 = vld [vmem:[%s3 + $0xf0] sm:$0xff]
            %v345 = vld [vmem:[%s3 + $0xf8] sm:$0xff]
            %v346 = vld [vmem:[%s4] sm:$0x1]
            %v347 = vmul.f32 %v346, 64.0
            %v349 = vlaneseq
            %v350 = vshrl.u32 %v349, 7
            %v351 = vsub.s32 0, %v350
            %v352 = vrot.slane %v313, %v351
            %v353 = vlaneseq
            %v354 = vshrl.u32 %v353, 7
            %v355 = vsub.s32 1, %v354
            %v356 = vrot.slane %v313, %v355
            %359 = vmatprep.subr.mxu0 0.0
            %360 = vmatpush1.msra.mxu0 %v329
            %361 = vmatprep.subr.mxu0 0.0
            %362 = vmatpush1.msra.mxu0 %v328
            %363 = vmatprep.subr.mxu0 0.0
            %364 = vmatpush1.msra.mxu0 %v327
            %365 = vmatprep.subr.mxu0 0.0
            %366 = vmatpush1.msra.mxu0 %v326
            %367 = vmatprep.subr.mxu0 0.0
            %368 = vmatpush1.msra.mxu0 %v325
            %369 = vmatprep.subr.mxu0 0.0
            %370 = vmatpush1.msra.mxu0 %v324
            %371 = vmatprep.subr.mxu0 0.0
            %372 = vmatpush1.msra.mxu0 %v323
            %373 = vmatprep.subr.mxu0 0.0
            %374 = vmatpush1.msra.mxu0 %v322
            %375 = vmatprep.subr.mxu0 0.0
            %376 = vmatpush1.msra.mxu0 %v321
            %377 = vmatprep.subr.mxu0 0.0
            %378 = vmatpush1.msra.mxu0 %v320
            %379 = vmatprep.subr.mxu0 0.0
            %380 = vmatpush1.msra.mxu0 %v319
            %381 = vmatprep.subr.mxu0 0.0
            %382 = vmatpush1.msra.mxu0 %v318
            %383 = vmatprep.subr.mxu0 0.0
            %384 = vmatpush1.msra.mxu0 %v317
            %385 = vmatprep.subr.mxu0 0.0
            %386 = vmatpush1.msra.mxu0 %v316
            %387 = vmatprep.subr.mxu0 0.0
            %388 = vmatpush1.msra.mxu0 %v315
            %389 = vmatprep.subr.mxu0 0.0
            %390 = vmatpush1.msra.mxu0 %v314
            %391 = vmatprep.subr.mxu0 0.0
            %392 = vmatpush2.msra.mxu0 %v345
            %393 = vmatprep.subr.mxu0 0.0
            %394 = vmatpush2.msra.mxu0 %v344
            %395 = vmatprep.subr.mxu0 0.0
            %396 = vmatpush2.msra.mxu0 %v343
            %397 = vmatprep.subr.mxu0 0.0
            %398 = vmatpush2.msra.mxu0 %v342
            %399 = vmatprep.subr.mxu0 0.0
            %400 = vmatpush2.msra.mxu0 %v341
            %401 = vmatprep.subr.mxu0 0.0
            %402 = vmatpush2.msra.mxu0 %v340
            %403 = vmatprep.subr.mxu0 0.0
            %404 = vmatpush2.msra.mxu0 %v339
            %405 = vmatprep.subr.mxu0 0.0
            %406 = vmatpush2.msra.mxu0 %v338
            %407 = vmatprep.subr.mxu0 0.0
            %408 = vmatpush2.msra.mxu0 %v337
            %409 = vmatprep.subr.mxu0 0.0
            %410 = vmatpush2.msra.mxu0 %v336
            %411 = vmatprep.subr.mxu0 0.0
            %412 = vmatpush2.msra.mxu0 %v335
            %413 = vmatprep.subr.mxu0 0.0
            %414 = vmatpush2.msra.mxu0 %v334
            %415 = vmatprep.subr.mxu0 0.0
            %416 = vmatpush2.msra.mxu0 %v333
            %417 = vmatprep.subr.mxu0 0.0
            %418 = vmatpush2.msra.mxu0 %v332
            %419 = vmatprep.subr.mxu0 0.0
            %420 = vmatpush2.msra.mxu0 %v331
            %421 = vmatprep.subr.mxu0 0.0
            %422 = vmatpush2.msra.mxu0 %v330
            %423 = vmatprep.mubr.f32.mxu0 %v356
            %424 = vmatmul.mubr.f32.gmra.mxu0 %v352
            %v425 = vpop.f32.mrf.mxu0
            %v426 = vadd.f32 %v347, %v425
            %v427 = vpop.f32.mrf.mxu0
            %428 = vdwg.mxu0
            %v429 = vld [vmem:[%s1] sm:$0xff]
            %v430 = vld [vmem:[%s1 + $0x8] sm:$0xff]
            %v431 = vld [vmem:[%s1 + $0x10] sm:$0xff]
            %v432 = vld [vmem:[%s1 + $0x18] sm:$0xff]
            %v433 = vld [vmem:[%s1 + $0x20] sm:$0xff]
            %v434 = vld [vmem:[%s1 + $0x28] sm:$0xff]
            %v435 = vld [vmem:[%s1 + $0x30] sm:$0xff]
            %v436 = vld [vmem:[%s1 + $0x38] sm:$0xff]
            %v437 = vld [vmem:[%s1 + $0x40] sm:$0xff]
            %v438 = vld [vmem:[%s1 + $0x48] sm:$0xff]
            %v439 = vld [vmem:[%s1 + $0x50] sm:$0xff]
            %v440 = vld [vmem:[%s1 + $0x58] sm:$0xff]
            %v441 = vld [vmem:[%s1 + $0x60] sm:$0xff]
            %v442 = vld [vmem:[%s1 + $0x68] sm:$0xff]
            %v443 = vld [vmem:[%s1 + $0x70] sm:$0xff]
            %v444 = vld [vmem:[%s1 + $0x78] sm:$0xff]
            %v445 = vld [vmem:[%s1 + $0x80] sm:$0xff]
            %v446 = vld [vmem:[%s1 + $0x88] sm:$0xff]
            %v447 = vld [vmem:[%s1 + $0x90] sm:$0xff]
            %v448 = vld [vmem:[%s1 + $0x98] sm:$0xff]
            %v449 = vld [vmem:[%s1 + $0xa0] sm:$0xff]
            %v450 = vld [vmem:[%s1 + $0xa8] sm:$0xff]
            %v451 = vld [vmem:[%s1 + $0xb0] sm:$0xff]
            %v452 = vld [vmem:[%s1 + $0xb8] sm:$0xff]
            %v453 = vld [vmem:[%s1 + $0xc0] sm:$0xff]
            %v454 = vld [vmem:[%s1 + $0xc8] sm:$0xff]
            %v455 = vld [vmem:[%s1 + $0xd0] sm:$0xff]
            %v456 = vld [vmem:[%s1 + $0xd8] sm:$0xff]
            %v457 = vld [vmem:[%s1 + $0xe0] sm:$0xff]
            %v458 = vld [vmem:[%s1 + $0xe8] sm:$0xff]
            %v459 = vld [vmem:[%s1 + $0xf0] sm:$0xff]
            %v460 = vld [vmem:[%s1 + $0xf8] sm:$0xff]
            %vm461 = vcmask 261120
            %v463 = vsel %vm461, %v426, 0
            %v466 = vsel %vm461, %v429, 0
            %v469 = vsel %vm461, %v430, 0
            %v472 = vsel %vm461, %v431, 0
            %v475 = vsel %vm461, %v432, 0
            %v478 = vsel %vm461, %v433, 0
            %v481 = vsel %vm461, %v434, 0
            %v484 = vsel %vm461, %v435, 0
            %v487 = vsel %vm461, %v436, 0
            %v490 = vsel %vm461, %v437, 0
            %v493 = vsel %vm461, %v438, 0
            %v496 = vsel %vm461, %v439, 0
            %v499 = vsel %vm461, %v440, 0
            %v502 = vsel %vm461, %v441, 0
            %v505 = vsel %vm461, %v442, 0
            %v508 = vsel %vm461, %v443, 0
            %v511 = vsel %vm461, %v444, 0
            %v514 = vsel %vm461, %v445, 0
            %v517 = vsel %vm461, %v446, 0
            %v520 = vsel %vm461, %v447, 0
            %v523 = vsel %vm461, %v448, 0
            %v526 = vsel %vm461, %v449, 0
            %v529 = vsel %vm461, %v450, 0
            %v532 = vsel %vm461, %v451, 0
            %v535 = vsel %vm461, %v452, 0
            %v538 = vsel %vm461, %v453, 0
            %v541 = vsel %vm461, %v454, 0
            %v544 = vsel %vm461, %v455, 0
            %v547 = vsel %vm461, %v456, 0
            %v550 = vsel %vm461, %v457, 0
            %v553 = vsel %vm461, %v458, 0
            %v556 = vsel %vm461, %v459, 0
            %v559 = vsel %vm461, %v460, 0
            %561 = vmatprep.subr.mxu0 0.0
            %562 = vmatpush1.xpose.msra.mxu0 %v511
            %563 = vmatprep.subr.mxu0 0.0
            %564 = vmatpush1.xpose.msra.mxu0 %v508
            %565 = vmatprep.subr.mxu0 0.0
            %566 = vmatpush1.xpose.msra.mxu0 %v505
            %567 = vmatprep.subr.mxu0 0.0
            %568 = vmatpush1.xpose.msra.mxu0 %v502
            %569 = vmatprep.subr.mxu0 0.0
            %570 = vmatpush1.xpose.msra.mxu0 %v499
            %571 = vmatprep.subr.mxu0 0.0
            %572 = vmatpush1.xpose.msra.mxu0 %v496
            %573 = vmatprep.subr.mxu0 0.0
            %574 = vmatpush1.xpose.msra.mxu0 %v493
            %575 = vmatprep.subr.mxu0 0.0
            %576 = vmatpush1.xpose.msra.mxu0 %v490
            %577 = vmatprep.subr.mxu0 0.0
            %578 = vmatpush1.xpose.msra.mxu0 %v487
            %579 = vmatprep.subr.mxu0 0.0
            %580 = vmatpush1.xpose.msra.mxu0 %v484
            %581 = vmatprep.subr.mxu0 0.0
            %582 = vmatpush1.xpose.msra.mxu0 %v481
            %583 = vmatprep.subr.mxu0 0.0
            %584 = vmatpush1.xpose.msra.mxu0 %v478
            %585 = vmatprep.subr.mxu0 0.0
            %586 = vmatpush1.xpose.msra.mxu0 %v475
            %587 = vmatprep.subr.mxu0 0.0
            %588 = vmatpush1.xpose.msra.mxu0 %v472
            %589 = vmatprep.subr.mxu0 0.0
            %590 = vmatpush1.xpose.msra.mxu0 %v469
            %591 = vmatprep.subr.mxu0 0.0
            %592 = vmatpush1.xpose.msra.mxu0 %v466
            %593 = vmatprep.subr.mxu0 0.0
            %594 = vmatpush2.xpose.msra.mxu0 %v559
            %595 = vmatprep.subr.mxu0 0.0
            %596 = vmatpush2.xpose.msra.mxu0 %v556
            %597 = vmatprep.subr.mxu0 0.0
            %598 = vmatpush2.xpose.msra.mxu0 %v553
            %599 = vmatprep.subr.mxu0 0.0
            %600 = vmatpush2.xpose.msra.mxu0 %v550
            %601 = vmatprep.subr.mxu0 0.0
            %602 = vmatpush2.xpose.msra.mxu0 %v547
            %603 = vmatprep.subr.mxu0 0.0
            %604 = vmatpush2.xpose.msra.mxu0 %v544
            %605 = vmatprep.subr.mxu0 0.0
            %606 = vmatpush2.xpose.msra.mxu0 %v541
            %607 = vmatprep.subr.mxu0 0.0
            %608 = vmatpush2.xpose.msra.mxu0 %v538
            %609 = vmatprep.subr.mxu0 0.0
            %610 = vmatpush2.xpose.msra.mxu0 %v535
            %611 = vmatprep.subr.mxu0 0.0
            %612 = vmatpush2.xpose.msra.mxu0 %v532
            %613 = vmatprep.subr.mxu0 0.0
            %614 = vmatpush2.xpose.msra.mxu0 %v529
            %615 = vmatprep.subr.mxu0 0.0
            %616 = vmatpush2.xpose.msra.mxu0 %v526
            %617 = vmatprep.subr.mxu0 0.0
            %618 = vmatpush2.xpose.msra.mxu0 %v523
            %619 = vmatprep.subr.mxu0 0.0
            %620 = vmatpush2.xpose.msra.mxu0 %v520
            %621 = vmatprep.subr.mxu0 0.0
            %622 = vmatpush2.xpose.msra.mxu0 %v517
            %623 = vmatprep.subr.mxu0 0.0
            %624 = vmatpush2.xpose.msra.mxu0 %v514
            %625 = vmatprep.mubr.f32.mxu0 0.0
            %626 = vmatmul.mubr.f32.gmra.mxu0 %v463
            %v627 = vpop.f32.mrf.mxu0
            %v628 = vadd.f32 0.0, %v627
            %v629 = vpop.f32.mrf.mxu0
            %v630 = vadd.f32 0.0, %v629
            %631 = vdwg.mxu0
            %v634 = vcombine.low %v628, %v630
            %v636 = vunpack.c.l.s4 1966171168
            %v637 = vunpack.c.0.s8 %v636
            %v638 = vlaneseq
            %v639 = vshrl.u32 %v638, 7
            %v640 = vsub.s32 %v637, %v639
            %v641 = vrot.slane %v634, %v640
            %v643 = vunpack.c.l.s4 1966171168
            %v644 = vunpack.c.0.s8 %v643
            %v645 = vlaneseq
            %v646 = vshrl.u32 %v645, 7
            %v647 = vsub.s32 %v644, %v646
            %v648 = vrot.slane %v641, %v647
            %v650 = vlaneseq
            %vm651 = vcmp.ge.s32.totalorder %v650, 0
            %vm652 = vcmp.lt.s32.totalorder %v650, 256
            %vm653 = vmand %vm651, %vm652
            %654 = vst.msk [vmem:[#allocation3] sm:$0x3] %vm653, %v648
            %v655 = vld [vmem:[%s2] sm:$0x1]
            %v656 = vmul.f32 %v655, %v426
            %vm657 = vcmask 253952
            %v658 = vsel %vm657, %v656, 0.0
            %659 = vadd.xlane.f32.xlu0 %v658
            %v660 = vpop.xlane.xlu0 %659
            %vm661 = vcmask 0
            %662 = vst.msk [vmem:[#allocation4] sm:$0x1] %vm661, %v660
          $region56: #{tpu_custom_call.1} parent=51 // pred_fallthru
            _
          %v663 = vld [vmem:[#allocation3] sm:$0x3]
          %v665 = vlaneseq
          %v666 = vshrl.u32 %v665, 7
          %v667 = vsub.s32 0, %v666
          %v668 = vrot.slane %v663, %v667
          %v669 = vlaneseq
          %v670 = vshrl.u32 %v669, 7
          %v671 = vsub.s32 1, %v670
          %v672 = vrot.slane %v663, %v671
          %v675 = vmul.f32 %v245, %v668
          %v676 = vmul.f32 %v246, %v672
          %v677 = vmul.f32 %v247, %v668
          %v678 = vmul.f32 %v248, %v672
          %v679 = vadd.f32 %v675, %v676
          %680 = vadd.xlane.f32.xlu0 %v679
          %v681 = vpop.xlane.xlu0 %680
          %v682 = vadd.f32 %v677, %v678
          %683 = vadd.xlane.f32.xlu0 %v682
          %v684 = vpop.xlane.xlu0 %683
          %v685 = vld [vmem:[#allocation4] sm:$0x1]
          %v687 = vlaneseq
          %v688 = vshrl.u32 %v687, 7
          %v689 = vsub.s32 0, %v688
          %v690 = vrot.slane %v685, %v689
          %v692 = vadd.f32 %v681, %v690
          %v693 = vadd.f32 %v684, %v690
          %v694 = vsel %vm235, %v692, -inf
          %v695 = vsel %vm236, %v693, -inf
          %v696 = vld [vmem:[#allocation5] sm:$0x1]
          %vm697 = vcmask 7168
          %v698 = vsel %vm697, %v694, -inf
          %v699 = vsel %vm697, %v695, -inf
          %v700 = vmax.f32 %v698, %v699
          %v701 = vrot.slane %v700, 4
          %v702 = vmax.f32 %v700, %v701
          %v703 = vrot.slane %v702, 2
          %v704 = vmax.f32 %v702, %v703
          %v705 = vrot.slane %v704, 1
          %v706 = vmax.f32 %v704, %v705
          %v707 = vmax.f32 %v696, %v706
          %v708 = vsub.f32 %v696, %v707
          %v709 = vmul.f32 %v708, 1.442695
          %v710 = vpow.pop %v709
          %v712 = vlaneseq
          %v713 = vshrl.u32 %v712, 7
          %v714 = vsub.s32 0, %v713
          %v715 = vrot.slane %v707, %v714
          %v717 = vsub.f32 %v694, %v715
          %v718 = vsub.f32 %v695, %v715
          %v719 = vmul.f32 %v717, 1.442695
          %v720 = vpow.pop %v719
          %v721 = vmul.f32 %v718, 1.442695
          %v722 = vpow.pop %v721
          %v723 = vld [vmem:[#allocation6] sm:$0x1]
          %v724 = vmul.f32 %v710, %v723
          %v725 = vsel %vm697, %v720, 0.0
          %v726 = vsel %vm697, %v722, 0.0
          %v727 = vadd.f32 %v725, %v726
          %v728 = vrot.slane %v727, 4
          %v729 = vadd.f32 %v727, %v728
          %v730 = vrot.slane %v729, 2
          %v731 = vadd.f32 %v729, %v730
          %v732 = vrot.slane %v731, 1
          %v733 = vadd.f32 %v731, %v732
          %v734 = vadd.f32 %v724, %v733
          %vm735 = vcmask 0
          %736 = vst.msk [vmem:[#allocation6] sm:$0x1] %vm735, %v734
          %v737 = vld [vmem:[#allocation7] sm:$0x3]
          %739 = vset.pattern.permute.xlu0 0
          %740 = vperm.xlu0 %739, %v710
          %v741 = vpop.permute.xlu0 %740
          %v743 = vlaneseq
          %v744 = vshrl.u32 %v743, 7
          %v745 = vsub.s32 0, %v744
          %v746 = vrot.slane %v741, %v745
          %v747 = vmul.f32 %v746, %v737
          %749 = vset.pattern.permute.xlu0 0
          %750 = vperm.xlu0 %749, %v720
          %v751 = vpop.permute.xlu0 %750
          %754 = vset.pattern.permute.xlu0 0
          %755 = vperm.xlu0 %754, %v722
          %v756 = vpop.permute.xlu0 %755
          %v758 = vmul.f32 %v751, %v245
          %v759 = vmul.f32 %v751, %v246
          %v760 = vmul.f32 %v756, %v247
          %v761 = vmul.f32 %v756, %v248
          %v762 = vadd.f32 %v758, %v760
          %v763 = vrot.slane %v762, 4
          %v764 = vadd.f32 %v762, %v763
          %v765 = vrot.slane %v764, 2
          %v766 = vadd.f32 %v764, %v765
          %v767 = vrot.slane %v766, 1
          %v768 = vadd.f32 %v766, %v767
          %v769 = vadd.f32 %v759, %v761
          %v770 = vrot.slane %v769, 4
          %v771 = vadd.f32 %v769, %v770
          %v772 = vrot.slane %v771, 2
          %v773 = vadd.f32 %v771, %v772
          %v774 = vrot.slane %v773, 1
          %v775 = vadd.f32 %v773, %v774
          %v778 = vcombine.low %v768, %v775
          %v780 = vunpack.c.l.s4 1966171168
          %v781 = vunpack.c.0.s8 %v780
          %v782 = vlaneseq
          %v783 = vshrl.u32 %v782, 7
          %v784 = vsub.s32 %v781, %v783
          %v785 = vrot.slane %v778, %v784
          %v787 = vunpack.c.l.s4 1966171168
          %v788 = vunpack.c.0.s8 %v787
          %v789 = vlaneseq
          %v790 = vshrl.u32 %v789, 7
          %v791 = vsub.s32 %v788, %v790
          %v792 = vrot.slane %v785, %v791
          %v794 = vadd.f32 %v747, %v792
          %v795 = vlaneseq
          %vm796 = vcmp.ge.s32.totalorder %v795, 0
          %vm797 = vcmp.lt.s32.totalorder %v795, 256
          %vm798 = vmand %vm796, %vm797
          %799 = vst.msk [vmem:[#allocation7] sm:$0x3] %vm798, %v794
          %800 = vst.msk [vmem:[#allocation5] sm:$0x1] %vm735, %v707
          %p801 = scmp.eq.s32.totalorder %s22, 3
          // Predicated region
          $region57: #{tpu_custom_call.1} parent=51 // pred_check
            %p802 = pneg %p801
          $region58: #{tpu_custom_call.1} parent=51 // pred_check_branch
            %804 = sbr.rel (%p802) target = $region60
          $region59: #{tpu_custom_call.1} parent=51 // pred_region
            %v805 = vld [vmem:[#allocation7] sm:$0x3]
            %v806 = vld [vmem:[#allocation6] sm:$0x1]
            %v807 = vrcp.pop %v806
            %809 = vset.pattern.permute.xlu0 0
            %810 = vperm.xlu0 %809, %v807
            %v811 = vpop.permute.xlu0 %810
            %v813 = vlaneseq
            %v814 = vshrl.u32 %v813, 7
            %v815 = vsub.s32 0, %v814
            %v816 = vrot.slane %v811, %v815
            %v817 = vmul.f32 %v805, %v816
            %818 = vst.msk [vmem:[#allocation8] sm:$0x3] %vm798, %v817
          $region60: #{tpu_custom_call.1} parent=51 // pred_fallthru
            _
        $region52: #{tpu_custom_call.1} parent=39 // pred_fallthru
          _
        // Predicated region
        $region61: #{tpu_custom_call.1} parent=39 // pred_check
          %p819 = pneg %p152
        $region62: #{tpu_custom_call.1} parent=39 // pred_check_branch
          %821 = sbr.rel (%p819) target = $region64
        $region63: #{tpu_custom_call.1} parent=39 // pred_region
          %s823 = ssub.s32 32, 32
          %824 = vsyncadd [#allocation9], %s823
          %s826 = sshll.u32 [#allocation8], 4
          %s827 = int_to_ptr.vmem [resolvable:$true] %s826
          %829 = dma.vmem_to_hbm [thread:$0]  %s827, 32, %s5, [#allocation9]
        $region64: #{tpu_custom_call.1} parent=39 // pred_fallthru
          _
        // Predicated region
        $region65: #{tpu_custom_call.1} parent=39 // pred_check
          %p830 = pneg %p152
        $region66: #{tpu_custom_call.1} parent=39 // pred_check_branch
          %832 = sbr.rel (%p830) target = $region68
        $region67: #{tpu_custom_call.1} parent=39 // pred_region
          %833 = dma.done [#allocation9], 32
        $region68: #{tpu_custom_call.1} parent=39 // pred_fallthru
          _
      $region40: #{tpu_custom_call.1} parent=5 // pred_fallthru
        _
      %p834 = scmp.le.s32.totalorder 2, %s12
      // Predicated region
      $region69: #{tpu_custom_call.1} parent=5 // pred_check
        %p835 = pneg %p834
      $region70: #{tpu_custom_call.1} parent=5 // pred_check_branch
        %837 = sbr.rel (%p835) target = $region72
      $region71: #{tpu_custom_call.1} parent=5 // pred_region
        %s838 = ssub.s32 %s12, 2
      $region72: #{tpu_custom_call.1} parent=5 // pred_fallthru
        _
    $region6: #{tpu_custom_call.1} parent=1 // loop_footer
      %s16 = sadd.s32 1, %s12
    $region7: #{tpu_custom_call.1} parent=1 // loop_footer_branch
      %11 = sbr.rel target = $region3
    $region8: #{tpu_custom_call.1} parent=1 // loop_exit
      _
    %839 = vsyncpa [#allocation9], 1
    %s840 = scalar_lea.sflag [#allocation9], 1
    %841 = vsyncpa %s840, 1

</llo_original>
